<compile_context>
chip_gen: v6e
topology: v6e:2x2x1
jax: 0.10.0
libtpu: 0.0.40
codegen_flags: <defaults>
</compile_context>

<pallas_src>
import jax
import jax.numpy as jnp
from jax.experimental import pallas as pl
from jax.experimental.pallas import tpu as pltpu


def _l2_normalize_kernel(m_ref, o_ref):
    # m_ref / o_ref: one (tile_rows, embed_dim) block of the embedding matrix.
    x = m_ref[...]
    xf = x.astype(jnp.float32)
    # Per-row L2 norm: lane-axis reduction (XLU), accumulated in f32.
    sq_sum = jnp.sum(xf * xf, axis=1, keepdims=True)
    # eps placement matches the PyTorch reference: x / (sqrt(sum(x^2)) + 1e-8).
    # Per-row scalar only -> cheap even with exact (non-approx) reciprocal.
    inv = pl.reciprocal(jnp.sqrt(sq_sum) + 1e-8, approx=False)
    # Scale in the native dtype (no full-tile f32 upcast on the store path).
    o_ref[...] = (x * inv.astype(x.dtype)).astype(o_ref.dtype)


def _round_up(n, m):
    return ((n + m - 1) // m) * m


def _choose_tile_rows(vocab_size, embed_dim, dtype,
                      target_block_bytes=6 * 1024 * 1024):
    """Pick tile_rows so one (tile_rows, embed_dim) block is ~target_block_bytes.

    Keeps the full embedding row in one block (lane-dense stores, single-pass row
    reduction) and respects sublane packing (8 rows for 32-bit, 16 for 16-bit dtypes).
    """
    itemsize = jnp.dtype(dtype).itemsize
    pack = 8 * max(1, 4 // itemsize)               # 8 (f32), 16 (bf16), 32 (int8)
    bytes_per_row = embed_dim * itemsize
    rows = max(pack, target_block_bytes // bytes_per_row)
    rows = (rows // pack) * pack                   # multiple of sublane packing
    rows = min(rows, _round_up(vocab_size, pack))  # don't exceed (padded) vocab
    return int(rows)


def _build_normalize_call(vocab_size, embed_dim, dtype, tile_rows,
                          vmem_limit_bytes, dim_semantics):
    grid = (pl.cdiv(vocab_size, tile_rows),)
    return pl.pallas_call(
        _l2_normalize_kernel,
        out_shape=jax.ShapeDtypeStruct((vocab_size, embed_dim), dtype),
        grid=grid,
        in_specs=[pl.BlockSpec((tile_rows, embed_dim), lambda i: (i, 0))],
        out_specs=pl.BlockSpec((tile_rows, embed_dim), lambda i: (i, 0)),
        compiler_params=pltpu.CompilerParams(
            dimension_semantics=dim_semantics,
            vmem_limit_bytes=vmem_limit_bytes,
        ),
    )


def embedding_matrix_forward(matrix, unnormalize=False, *, tile_rows=None,
                             vmem_limit_bytes=48 * 1024 * 1024,
                             core_parallel=None):
    """Equivalent of EmbeddingMatrix.forward.

    matrix: (vocab_size, embed_dim) float array (the module's parameter).
    core_parallel: True  -> force CORE_PARALLEL grid semantics,
                   False -> plain "parallel",
                   None  -> try CORE_PARALLEL, fall back to "parallel" on failure.
    """
    if unnormalize:
        # Pure parameter pass-through; no kernel needed.
        return matrix

    vocab_size, embed_dim = matrix.shape
    if tile_rows is None:
        tile_rows = _choose_tile_rows(vocab_size, embed_dim, matrix.dtype)

    args = (vocab_size, embed_dim, matrix.dtype, tile_rows, vmem_limit_bytes)

    if core_parallel is False:
        return _build_normalize_call(*args, ("parallel",))(matrix)
    if core_parallel is True:
        return _build_normalize_call(*args, (pltpu.CORE_PARALLEL,))(matrix)

    # Auto: prefer CORE_PARALLEL so the row grid shards across both TensorCores on
    # v7x (~2x effective HBM bandwidth for a bandwidth-bound kernel); single-TC
    # chips simply run everything on core 0.  Fall back to "parallel" if the
    # target chip/compiler rejects CORE_PARALLEL (only effective in eager mode).
    try:
        out = _build_normalize_call(*args, (pltpu.CORE_PARALLEL,))(matrix)
        return jax.block_until_ready(out)
    except Exception:
        return _build_normalize_call(*args, ("parallel",))(matrix)


def init_embedding_matrix(key, vocab_size, embed_dim, dtype=jnp.float32):
    """Deterministic init mirroring EmbeddingMatrix.__init__:
    randn(vocab, embed) then divide each row by its L2 norm."""
    m = jax.random.normal(key, (vocab_size, embed_dim), dtype=jnp.float32)
    norm = jnp.linalg.norm(m, axis=1, keepdims=True)
    return (m / norm).astype(dtype)


if __name__ == "__main__":
    key = jax.random.PRNGKey(0)

    # --- Case 1: small, lane-aligned shape (matches the module's forward) ---
    vocab_size, embed_dim = 64, 128
    matrix = init_embedding_matrix(key, vocab_size, embed_dim)

    out = embedding_matrix_forward(matrix, unnormalize=False)
    out = jax.block_until_ready(out)

    ref = matrix / (jnp.linalg.norm(matrix, axis=1, keepdims=True) + 1e-8)
    assert out.shape == (vocab_size, embed_dim)
    assert out.dtype == matrix.dtype
    assert jnp.allclose(out, ref, atol=1e-6, rtol=1e-6)

    # unnormalize=True path is just the parameter pass-through (no kernel needed)
    raw = embedding_matrix_forward(matrix, unnormalize=True)
    assert jnp.array_equal(raw, matrix)

    # --- Case 2: vocab not divisible by tile_rows (exercises pl.cdiv + padding) ---
    key2 = jax.random.PRNGKey(0)
    vocab2, embed2 = 1000, 256
    matrix2 = init_embedding_matrix(key2, vocab2, embed2)
    out2 = jax.block_until_ready(
        embedding_matrix_forward(matrix2, tile_rows=256))
    ref2 = matrix2 / (jnp.linalg.norm(matrix2, axis=1, keepdims=True) + 1e-8)
    assert out2.shape == (vocab2, embed2)
    assert jnp.allclose(out2, ref2, atol=1e-6, rtol=1e-6)

    # --- Case 3: bf16 matrix (exercises the native-dtype store path) ---
    key3 = jax.random.PRNGKey(0)
    vocab3, embed3 = 48, 128
    matrix3 = init_embedding_matrix(key3, vocab3, embed3, dtype=jnp.bfloat16)
    out3 = jax.block_until_ready(embedding_matrix_forward(matrix3))
    m3f = matrix3.astype(jnp.float32)
    ref3 = m3f / (jnp.linalg.norm(m3f, axis=1, keepdims=True) + 1e-8)
    assert out3.shape == (vocab3, embed3)
    assert out3.dtype == jnp.bfloat16
    assert jnp.allclose(out3.astype(jnp.float32), ref3, atol=2e-2, rtol=2e-2)

    print("KERNEL_OK")
</pallas_src>

<mosaic_0001>
module attributes {stable_mosaic.version = 11 : i64} {
  func.func @_l2_normalize_kernel(%arg0: i32, %arg1: memref<64x128xf32, #tpu.memory_space<vmem>>, %arg2: memref<64x128xf32, #tpu.memory_space<vmem>>) attributes {dimension_semantics = [#tpu.dimension_semantics<core_parallel>], iteration_bounds = array<i64: 1>, scalar_prefetch = 0 : i64, scratch_operands = 0 : i64, tpu.core_type = #tpu.core_type<tc>, window_params = [{transform_indices = @transform_0, window_bounds = array<i64: 64, 128>}, {transform_indices = @transform_1, window_bounds = array<i64: 64, 128>}]} {
    %c0 = arith.constant 0 : index
    %c0_0 = arith.constant 0 : index
    %0 = vector.load %arg1[%c0, %c0_0] : memref<64x128xf32, #tpu.memory_space<vmem>>, vector<64x128xf32>
    %1 = arith.mulf %0, %0 : vector<64x128xf32>
    %cst = arith.constant dense<0.000000e+00> : vector<64xf32>
    %2 = vector.multi_reduction <add>, %1, %cst [1] : vector<64x128xf32> to vector<64xf32>
    %3 = vector.shape_cast %2 : vector<64xf32> to vector<64x1xf32>
    %4 = math.sqrt %3 : vector<64x1xf32>
    %cst_1 = arith.constant 9.99999993E-9 : f32
    %5 = vector.broadcast %cst_1 : f32 to vector<64x1xf32>
    %6 = arith.addf %4, %5 : vector<64x1xf32>
    %7 = tpu.reciprocal %6 : vector<64x1xf32> -> vector<64x1xf32>
    %8 = vector.broadcast %7 : vector<64x1xf32> to vector<64x128xf32>
    %9 = arith.mulf %0, %8 : vector<64x128xf32>
    %c0_2 = arith.constant 0 : index
    %c0_3 = arith.constant 0 : index
    %10 = vector.load %arg2[%c0_2, %c0_3] : memref<64x128xf32, #tpu.memory_space<vmem>>, vector<64x128xf32>
    tpu.vector_store %arg2[%c0_2, %c0_3], %9 {strides = array<i32>} : memref<64x128xf32, #tpu.memory_space<vmem>>, vector<64x128xf32>,
    return
  }
  func.func @transform_0(%arg0: i32) -> (i32, i32) {
    %c0_i32 = arith.constant 0 : i32
    %c0_i32_0 = arith.constant 0 : i32
    return %arg0, %c0_i32 : i32, i32
  }
  func.func @transform_1(%arg0: i32) -> (i32, i32) {
    %c0_i32 = arith.constant 0 : i32
    %c0_i32_0 = arith.constant 0 : i32
    return %arg0, %c0_i32 : i32, i32
  }
}

module attributes {stable_mosaic.version = 11 : i64} {
  func.func @_l2_normalize_kernel(%arg0: i32, %arg1: memref<64x128xf32, #tpu.memory_space<vmem>>, %arg2: memref<64x128xf32, #tpu.memory_space<vmem>>) attributes {dimension_semantics = [#tpu.dimension_semantics<parallel>], iteration_bounds = array<i64: 1>, scalar_prefetch = 0 : i64, scratch_operands = 0 : i64, tpu.core_type = #tpu.core_type<tc>, window_params = [{transform_indices = @transform_0, window_bounds = array<i64: 64, 128>}, {transform_indices = @transform_1, window_bounds = array<i64: 64, 128>}]} {
    %c0 = arith.constant 0 : index
    %c0_0 = arith.constant 0 : index
    %0 = vector.load %arg1[%c0, %c0_0] : memref<64x128xf32, #tpu.memory_space<vmem>>, vector<64x128xf32>
    %1 = arith.mulf %0, %0 : vector<64x128xf32>
    %cst = arith.constant dense<0.000000e+00> : vector<64xf32>
    %2 = vector.multi_reduction <add>, %1, %cst [1] : vector<64x128xf32> to vector<64xf32>
    %3 = vector.shape_cast %2 : vector<64xf32> to vector<64x1xf32>
    %4 = math.sqrt %3 : vector<64x1xf32>
    %cst_1 = arith.constant 9.99999993E-9 : f32
    %5 = vector.broadcast %cst_1 : f32 to vector<64x1xf32>
    %6 = arith.addf %4, %5 : vector<64x1xf32>
    %7 = tpu.reciprocal %6 : vector<64x1xf32> -> vector<64x1xf32>
    %8 = vector.broadcast %7 : vector<64x1xf32> to vector<64x128xf32>
    %9 = arith.mulf %0, %8 : vector<64x128xf32>
    %c0_2 = arith.constant 0 : index
    %c0_3 = arith.constant 0 : index
    %10 = vector.load %arg2[%c0_2, %c0_3] : memref<64x128xf32, #tpu.memory_space<vmem>>, vector<64x128xf32>
    tpu.vector_store %arg2[%c0_2, %c0_3], %9 {strides = array<i32>} : memref<64x128xf32, #tpu.memory_space<vmem>>, vector<64x128xf32>,
    return
  }
  func.func @transform_0(%arg0: i32) -> (i32, i32) {
    %c0_i32 = arith.constant 0 : i32
    %c0_i32_0 = arith.constant 0 : i32
    return %arg0, %c0_i32 : i32, i32
  }
  func.func @transform_1(%arg0: i32) -> (i32, i32) {
    %c0_i32 = arith.constant 0 : i32
    %c0_i32_0 = arith.constant 0 : i32
    return %arg0, %c0_i32 : i32, i32
  }
}

</mosaic_0001>

<llo_original>
// kernel: tpu_custom_call.1
$region0: #{tpu_custom_call.1}
  #allocation0 [shape = 'u32[]', space=smem, size = 0x4, offset = 0x4, fixed_abs, tag = 'smem constant byte address 0x4 - core index']
  #allocation1 [shape = 'u32[144,128]{1,0:T(1,128)}', space=vmem, size = 0x12000, scoped, tag = 'internal scratch']
  %s0 = inlined_call_operand.hbm [shape: f32[64,128], index: 0, kind: input, shape index: {}]
  %s1 = inlined_call_operand.hbm [shape: f32[64,128], index: 1, kind: output, shape index: {}]
  %s2 = sld [smem:[#allocation0]]
  $region18: #{tpu_custom_call.1} parent=0
    _
  %s4 = ssub.s32 1, %s2
  %s5 = scalar_select 0, %s4, %s2
  $region1: #{tpu_custom_call.1} parent=0
    #allocation2 [shape = 'u8[32768]{0}', space=vmem, size = 0x8000, scoped, tag = 'input window, operand 0, single buffered']
    #allocation3 [shape = 's32[1]{0}', space=sflag, size = 0x4, scoped, tag = 'scoped memory for tpu_custom_call.1']
    #allocation4 [shape = 's32[1]{0}', space=sflag, size = 0x4, scoped, tag = 'scoped memory for tpu_custom_call.1']
    #allocation5 [shape = 'u8[32768]{0}', space=vmem, size = 0x8000, scoped, tag = 'output window, operand 0, single buffered']
    %6 = vsyncpa [#allocation3], 0
    %7 = vsyncpa [#allocation4], 0
    // Predicated region
    $region2: #{tpu_custom_call.1} parent=1 // pred_check
      _
    $region3: #{tpu_custom_call.1} parent=1 // pred_check_branch
      %9 = sbr.rel (0) target = $region5
    $region4: #{tpu_custom_call.1} parent=1 // pred_region
      %s10 = smul.u32 8, %s5
      %s12 = ssub.s32 1024, 1024
      %13 = vsyncadd [#allocation3], %s12
      %s14 = smul.addr %s10, 128
      %s15 = scalar_lea.hbm %s0, %s14
      %s16 = sshll.u32 [#allocation2], 4
      %s17 = int_to_ptr.vmem [resolvable:$true] %s16
      %22 = dma.hbm_to_vmem [thread:$0]  %s15, 1024, %s17, [#allocation3], 128, 128, 8
    $region5: #{tpu_custom_call.1} parent=1 // pred_fallthru
      _
    // Predicated region
    $region6: #{tpu_custom_call.1} parent=1 // pred_check
      _
    $region7: #{tpu_custom_call.1} parent=1 // pred_check_branch
      %24 = sbr.rel (0) target = $region9
    $region8: #{tpu_custom_call.1} parent=1 // pred_region
      %25 = dma.done [#allocation3], 1024
    $region9: #{tpu_custom_call.1} parent=1 // pred_fallthru
      _
    %s26 = smul.u32 8, %s5
    %s27 = smul.u32 8, %s5
    %v28 = vld [vmem:[#allocation2] sm:$0xff]
    %v29 = vld [vmem:[#allocation2 + $0x8] sm:$0xff]
    %v30 = vld [vmem:[#allocation2 + $0x10] sm:$0xff]
    %v31 = vld [vmem:[#allocation2 + $0x18] sm:$0xff]
    %v32 = vld [vmem:[#allocation2 + $0x20] sm:$0xff]
    %v33 = vld [vmem:[#allocation2 + $0x28] sm:$0xff]
    %v34 = vld [vmem:[#allocation2 + $0x30] sm:$0xff]
    %v35 = vld [vmem:[#allocation2 + $0x38] sm:$0xff]
    %v36 = vmul.f32 %v28, %v28
    %v37 = vmul.f32 %v29, %v29
    %v38 = vmul.f32 %v30, %v30
    %v39 = vmul.f32 %v31, %v31
    %v40 = vmul.f32 %v32, %v32
    %v41 = vmul.f32 %v33, %v33
    %v42 = vmul.f32 %v34, %v34
    %v43 = vmul.f32 %v35, %v35
    %44 = vadd.xlane.f32.xlu0 %v36
    %v45 = vpop.xlane.xlu0 %44
    %46 = vadd.xlane.f32.xlu0 %v37
    %v47 = vpop.xlane.xlu0 %46
    %48 = vadd.xlane.f32.xlu0 %v38
    %v49 = vpop.xlane.xlu0 %48
    %50 = vadd.xlane.f32.xlu0 %v39
    %v51 = vpop.xlane.xlu0 %50
    %52 = vadd.xlane.f32.xlu0 %v40
    %v53 = vpop.xlane.xlu0 %52
    %54 = vadd.xlane.f32.xlu0 %v41
    %v55 = vpop.xlane.xlu0 %54
    %56 = vadd.xlane.f32.xlu0 %v42
    %v57 = vpop.xlane.xlu0 %56
    %58 = vadd.xlane.f32.xlu0 %v43
    %v59 = vpop.xlane.xlu0 %58
    %v60 = vrsqrt.pop %v45
    %v61 = vmul.f32 %v45, %v60
    %vm62 = vcmp.eq.f32.partialorder %v45, inf
    %v63 = vsel %vm62, %v45, %v61
    %vm64 = vcmp.eq.f32.partialorder %v45, 0.0
    %v65 = vand.u32 %v45, 2147483648
    %v66 = vsel %vm64, %v65, %v63
    %v67 = vrsqrt.pop %v47
    %v68 = vmul.f32 %v47, %v67
    %vm69 = vcmp.eq.f32.partialorder %v47, inf
    %v70 = vsel %vm69, %v47, %v68
    %vm71 = vcmp.eq.f32.partialorder %v47, 0.0
    %v72 = vand.u32 %v47, 2147483648
    %v73 = vsel %vm71, %v72, %v70
    %v74 = vrsqrt.pop %v49
    %v75 = vmul.f32 %v49, %v74
    %vm76 = vcmp.eq.f32.partialorder %v49, inf
    %v77 = vsel %vm76, %v49, %v75
    %vm78 = vcmp.eq.f32.partialorder %v49, 0.0
    %v79 = vand.u32 %v49, 2147483648
    %v80 = vsel %vm78, %v79, %v77
    %v81 = vrsqrt.pop %v51
    %v82 = vmul.f32 %v51, %v81
    %vm83 = vcmp.eq.f32.partialorder %v51, inf
    %v84 = vsel %vm83, %v51, %v82
    %vm85 = vcmp.eq.f32.partialorder %v51, 0.0
    %v86 = vand.u32 %v51, 2147483648
    %v87 = vsel %vm85, %v86, %v84
    %v88 = vrsqrt.pop %v53
    %v89 = vmul.f32 %v53, %v88
    %vm90 = vcmp.eq.f32.partialorder %v53, inf
    %v91 = vsel %vm90, %v53, %v89
    %vm92 = vcmp.eq.f32.partialorder %v53, 0.0
    %v93 = vand.u32 %v53, 2147483648
    %v94 = vsel %vm92, %v93, %v91
    %v95 = vrsqrt.pop %v55
    %v96 = vmul.f32 %v55, %v95
    %vm97 = vcmp.eq.f32.partialorder %v55, inf
    %v98 = vsel %vm97, %v55, %v96
    %vm99 = vcmp.eq.f32.partialorder %v55, 0.0
    %v100 = vand.u32 %v55, 2147483648
    %v101 = vsel %vm99, %v100, %v98
    %v102 = vrsqrt.pop %v57
    %v103 = vmul.f32 %v57, %v102
    %vm104 = vcmp.eq.f32.partialorder %v57, inf
    %v105 = vsel %vm104, %v57, %v103
    %vm106 = vcmp.eq.f32.partialorder %v57, 0.0
    %v107 = vand.u32 %v57, 2147483648
    %v108 = vsel %vm106, %v107, %v105
    %v109 = vrsqrt.pop %v59
    %v110 = vmul.f32 %v59, %v109
    %vm111 = vcmp.eq.f32.partialorder %v59, inf
    %v112 = vsel %vm111, %v59, %v110
    %vm113 = vcmp.eq.f32.partialorder %v59, 0.0
    %v114 = vand.u32 %v59, 2147483648
    %v115 = vsel %vm113, %v114, %v112
    %v116 = vadd.f32 %v66, 1e-08
    %v117 = vadd.f32 %v73, 1e-08
    %v118 = vadd.f32 %v80, 1e-08
    %v119 = vadd.f32 %v87, 1e-08
    %v120 = vadd.f32 %v94, 1e-08
    %v121 = vadd.f32 %v101, 1e-08
    %v122 = vadd.f32 %v108, 1e-08
    %v123 = vadd.f32 %v115, 1e-08
    %v124 = vrcp.pop %v116
    %v125 = vrcp.pop %v117
    %v126 = vrcp.pop %v118
    %v127 = vrcp.pop %v119
    %v128 = vrcp.pop %v120
    %v129 = vrcp.pop %v121
    %v130 = vrcp.pop %v122
    %v131 = vrcp.pop %v123
    %v132 = vmul.f32 %v28, %v124
    %v133 = vmul.f32 %v29, %v125
    %v134 = vmul.f32 %v30, %v126
    %v135 = vmul.f32 %v31, %v127
    %v136 = vmul.f32 %v32, %v128
    %v137 = vmul.f32 %v33, %v129
    %v138 = vmul.f32 %v34, %v130
    %v139 = vmul.f32 %v35, %v131
    %140 = vst [vmem:[#allocation5] sm:$0xff] %v132
    %141 = vst [vmem:[#allocation5 + $0x8] sm:$0xff] %v133
    %142 = vst [vmem:[#allocation5 + $0x10] sm:$0xff] %v134
    %143 = vst [vmem:[#allocation5 + $0x18] sm:$0xff] %v135
    %144 = vst [vmem:[#allocation5 + $0x20] sm:$0xff] %v136
    %145 = vst [vmem:[#allocation5 + $0x28] sm:$0xff] %v137
    %146 = vst [vmem:[#allocation5 + $0x30] sm:$0xff] %v138
    %147 = vst [vmem:[#allocation5 + $0x38] sm:$0xff] %v139
    // Predicated region
    $region10: #{tpu_custom_call.1} parent=1 // pred_check
      _
    $region11: #{tpu_custom_call.1} parent=1 // pred_check_branch
      %149 = sbr.rel (0) target = $region13
    $region12: #{tpu_custom_call.1} parent=1 // pred_region
      %s150 = smul.u32 8, %s5
      %s152 = ssub.s32 1024, 1024
      %153 = vsyncadd [#allocation4], %s152
      %s154 = smul.addr %s150, 128
      %s155 = scalar_lea.hbm %s1, %s154
      %s156 = sshll.u32 [#allocation5], 4
      %s157 = int_to_ptr.vmem [resolvable:$true] %s156
      %162 = dma.vmem_to_hbm [thread:$0]  %s157, 1024, %s155, [#allocation4], 128, 128, 8
    $region13: #{tpu_custom_call.1} parent=1 // pred_fallthru
      _
    // Predicated region
    $region14: #{tpu_custom_call.1} parent=1 // pred_check
      _
    $region15: #{tpu_custom_call.1} parent=1 // pred_check_branch
      %164 = sbr.rel (0) target = $region17
    $region16: #{tpu_custom_call.1} parent=1 // pred_region
      %165 = dma.done [#allocation4], 1024
    $region17: #{tpu_custom_call.1} parent=1 // pred_fallthru
      _
    %166 = vsyncpa [#allocation3], 1
    %167 = vsyncpa [#allocation4], 1

// kernel: tpu_custom_call.1
$region0: #{tpu_custom_call.1}
  #allocation0 [shape = 'u32[]', space=smem, size = 0x4, offset = 0x4, fixed_abs, tag = 'smem constant byte address 0x4 - core index']
  #allocation1 [shape = 'u32[144,128]{1,0:T(1,128)}', space=vmem, size = 0x12000, scoped, tag = 'internal scratch']
  %s0 = inlined_call_operand.hbm [shape: f32[64,128], index: 0, kind: input, shape index: {}]
  %s1 = inlined_call_operand.hbm [shape: f32[64,128], index: 1, kind: output, shape index: {}]
  %s2 = sld [smem:[#allocation0]]
  $region18: #{tpu_custom_call.1} parent=0
    _
  %s4 = ssub.s32 1, %s2
  %s5 = scalar_select 0, %s4, %s2
  $region1: #{tpu_custom_call.1} parent=0
    #allocation2 [shape = 'u8[32768]{0}', space=vmem, size = 0x8000, scoped, tag = 'input window, operand 0, single buffered']
    #allocation3 [shape = 's32[1]{0}', space=sflag, size = 0x4, scoped, tag = 'scoped memory for tpu_custom_call.1']
    #allocation4 [shape = 's32[1]{0}', space=sflag, size = 0x4, scoped, tag = 'scoped memory for tpu_custom_call.1']
    #allocation5 [shape = 'u8[32768]{0}', space=vmem, size = 0x8000, scoped, tag = 'output window, operand 0, single buffered']
    %6 = vsyncpa [#allocation3], 0
    %7 = vsyncpa [#allocation4], 0
    // Predicated region
    $region2: #{tpu_custom_call.1} parent=1 // pred_check
      _
    $region3: #{tpu_custom_call.1} parent=1 // pred_check_branch
      %9 = sbr.rel (0) target = $region5
    $region4: #{tpu_custom_call.1} parent=1 // pred_region
      %s11 = ssub.s32 1024, 1024
      %12 = vsyncadd [#allocation3], %s11
      %s13 = sshll.u32 [#allocation2], 4
      %s14 = int_to_ptr.vmem [resolvable:$true] %s13
      %19 = dma.hbm_to_vmem [thread:$0]  %s0, 1024, %s14, [#allocation3], 128, 128, 8
    $region5: #{tpu_custom_call.1} parent=1 // pred_fallthru
      _
    // Predicated region
    $region6: #{tpu_custom_call.1} parent=1 // pred_check
      _
    $region7: #{tpu_custom_call.1} parent=1 // pred_check_branch
      %21 = sbr.rel (0) target = $region9
    $region8: #{tpu_custom_call.1} parent=1 // pred_region
      %22 = dma.done [#allocation3], 1024
    $region9: #{tpu_custom_call.1} parent=1 // pred_fallthru
      _
    %v23 = vld [vmem:[#allocation2] sm:$0xff]
    %v24 = vld [vmem:[#allocation2 + $0x8] sm:$0xff]
    %v25 = vld [vmem:[#allocation2 + $0x10] sm:$0xff]
    %v26 = vld [vmem:[#allocation2 + $0x18] sm:$0xff]
    %v27 = vld [vmem:[#allocation2 + $0x20] sm:$0xff]
    %v28 = vld [vmem:[#allocation2 + $0x28] sm:$0xff]
    %v29 = vld [vmem:[#allocation2 + $0x30] sm:$0xff]
    %v30 = vld [vmem:[#allocation2 + $0x38] sm:$0xff]
    %v31 = vmul.f32 %v23, %v23
    %v32 = vmul.f32 %v24, %v24
    %v33 = vmul.f32 %v25, %v25
    %v34 = vmul.f32 %v26, %v26
    %v35 = vmul.f32 %v27, %v27
    %v36 = vmul.f32 %v28, %v28
    %v37 = vmul.f32 %v29, %v29
    %v38 = vmul.f32 %v30, %v30
    %39 = vadd.xlane.f32.xlu0 %v31
    %v40 = vpop.xlane.xlu0 %39
    %41 = vadd.xlane.f32.xlu0 %v32
    %v42 = vpop.xlane.xlu0 %41
    %43 = vadd.xlane.f32.xlu0 %v33
    %v44 = vpop.xlane.xlu0 %43
    %45 = vadd.xlane.f32.xlu0 %v34
    %v46 = vpop.xlane.xlu0 %45
    %47 = vadd.xlane.f32.xlu0 %v35
    %v48 = vpop.xlane.xlu0 %47
    %49 = vadd.xlane.f32.xlu0 %v36
    %v50 = vpop.xlane.xlu0 %49
    %51 = vadd.xlane.f32.xlu0 %v37
    %v52 = vpop.xlane.xlu0 %51
    %53 = vadd.xlane.f32.xlu0 %v38
    %v54 = vpop.xlane.xlu0 %53
    %v55 = vrsqrt.pop %v40
    %v56 = vmul.f32 %v40, %v55
    %vm57 = vcmp.eq.f32.partialorder %v40, inf
    %v58 = vsel %vm57, %v40, %v56
    %vm59 = vcmp.eq.f32.partialorder %v40, 0.0
    %v60 = vand.u32 %v40, 2147483648
    %v61 = vsel %vm59, %v60, %v58
    %v62 = vrsqrt.pop %v42
    %v63 = vmul.f32 %v42, %v62
    %vm64 = vcmp.eq.f32.partialorder %v42, inf
    %v65 = vsel %vm64, %v42, %v63
    %vm66 = vcmp.eq.f32.partialorder %v42, 0.0
    %v67 = vand.u32 %v42, 2147483648
    %v68 = vsel %vm66, %v67, %v65
    %v69 = vrsqrt.pop %v44
    %v70 = vmul.f32 %v44, %v69
    %vm71 = vcmp.eq.f32.partialorder %v44, inf
    %v72 = vsel %vm71, %v44, %v70
    %vm73 = vcmp.eq.f32.partialorder %v44, 0.0
    %v74 = vand.u32 %v44, 2147483648
    %v75 = vsel %vm73, %v74, %v72
    %v76 = vrsqrt.pop %v46
    %v77 = vmul.f32 %v46, %v76
    %vm78 = vcmp.eq.f32.partialorder %v46, inf
    %v79 = vsel %vm78, %v46, %v77
    %vm80 = vcmp.eq.f32.partialorder %v46, 0.0
    %v81 = vand.u32 %v46, 2147483648
    %v82 = vsel %vm80, %v81, %v79
    %v83 = vrsqrt.pop %v48
    %v84 = vmul.f32 %v48, %v83
    %vm85 = vcmp.eq.f32.partialorder %v48, inf
    %v86 = vsel %vm85, %v48, %v84
    %vm87 = vcmp.eq.f32.partialorder %v48, 0.0
    %v88 = vand.u32 %v48, 2147483648
    %v89 = vsel %vm87, %v88, %v86
    %v90 = vrsqrt.pop %v50
    %v91 = vmul.f32 %v50, %v90
    %vm92 = vcmp.eq.f32.partialorder %v50, inf
    %v93 = vsel %vm92, %v50, %v91
    %vm94 = vcmp.eq.f32.partialorder %v50, 0.0
    %v95 = vand.u32 %v50, 2147483648
    %v96 = vsel %vm94, %v95, %v93
    %v97 = vrsqrt.pop %v52
    %v98 = vmul.f32 %v52, %v97
    %vm99 = vcmp.eq.f32.partialorder %v52, inf
    %v100 = vsel %vm99, %v52, %v98
    %vm101 = vcmp.eq.f32.partialorder %v52, 0.0
    %v102 = vand.u32 %v52, 2147483648
    %v103 = vsel %vm101, %v102, %v100
    %v104 = vrsqrt.pop %v54
    %v105 = vmul.f32 %v54, %v104
    %vm106 = vcmp.eq.f32.partialorder %v54, inf
    %v107 = vsel %vm106, %v54, %v105
    %vm108 = vcmp.eq.f32.partialorder %v54, 0.0
    %v109 = vand.u32 %v54, 2147483648
    %v110 = vsel %vm108, %v109, %v107
    %v111 = vadd.f32 %v61, 1e-08
    %v112 = vadd.f32 %v68, 1e-08
    %v113 = vadd.f32 %v75, 1e-08
    %v114 = vadd.f32 %v82, 1e-08
    %v115 = vadd.f32 %v89, 1e-08
    %v116 = vadd.f32 %v96, 1e-08
    %v117 = vadd.f32 %v103, 1e-08
    %v118 = vadd.f32 %v110, 1e-08
    %v119 = vrcp.pop %v111
    %v120 = vrcp.pop %v112
    %v121 = vrcp.pop %v113
    %v122 = vrcp.pop %v114
    %v123 = vrcp.pop %v115
    %v124 = vrcp.pop %v116
    %v125 = vrcp.pop %v117
    %v126 = vrcp.pop %v118
    %v127 = vmul.f32 %v23, %v119
    %v128 = vmul.f32 %v24, %v120
    %v129 = vmul.f32 %v25, %v121
    %v130 = vmul.f32 %v26, %v122
    %v131 = vmul.f32 %v27, %v123
    %v132 = vmul.f32 %v28, %v124
    %v133 = vmul.f32 %v29, %v125
    %v134 = vmul.f32 %v30, %v126
    %135 = vst [vmem:[#allocation5] sm:$0xff] %v127
    %136 = vst [vmem:[#allocation5 + $0x8] sm:$0xff] %v128
    %137 = vst [vmem:[#allocation5 + $0x10] sm:$0xff] %v129
    %138 = vst [vmem:[#allocation5 + $0x18] sm:$0xff] %v130
    %139 = vst [vmem:[#allocation5 + $0x20] sm:$0xff] %v131
    %140 = vst [vmem:[#allocation5 + $0x28] sm:$0xff] %v132
    %141 = vst [vmem:[#allocation5 + $0x30] sm:$0xff] %v133
    %142 = vst [vmem:[#allocation5 + $0x38] sm:$0xff] %v134
    // Predicated region
    $region10: #{tpu_custom_call.1} parent=1 // pred_check
      _
    $region11: #{tpu_custom_call.1} parent=1 // pred_check_branch
      %144 = sbr.rel (0) target = $region13
    $region12: #{tpu_custom_call.1} parent=1 // pred_region
      %s146 = ssub.s32 1024, 1024
      %147 = vsyncadd [#allocation4], %s146
      %s148 = sshll.u32 [#allocation5], 4
      %s149 = int_to_ptr.vmem [resolvable:$true] %s148
      %154 = dma.vmem_to_hbm [thread:$0]  %s149, 1024, %s1, [#allocation4], 128, 128, 8
    $region13: #{tpu_custom_call.1} parent=1 // pred_fallthru
      _
    // Predicated region
    $region14: #{tpu_custom_call.1} parent=1 // pred_check
      _
    $region15: #{tpu_custom_call.1} parent=1 // pred_check_branch
      %156 = sbr.rel (0) target = $region17
    $region16: #{tpu_custom_call.1} parent=1 // pred_region
      %157 = dma.done [#allocation4], 1024
    $region17: #{tpu_custom_call.1} parent=1 // pred_fallthru
      _
    %158 = vsyncpa [#allocation3], 1
    %159 = vsyncpa [#allocation4], 1

</llo_original>
